<compile_context>
chip_gen: v7x
topology: tpu7x:2x2x1
jax: 0.10.0
libtpu: 0.0.40
codegen_flags: <defaults>
</compile_context>

<pallas_src>
import functools

import jax
import jax.numpy as jnp
from jax.experimental import pallas as pl
from jax.experimental.pallas import tpu as pltpu


def _round_up(x, m):
    return (x + m - 1) // m * m


# --------------------------------------------------------------------------- #
# Kernel
# --------------------------------------------------------------------------- #
def _attention_kernel(nb, g_ref, x_ref, wg_ref, wx_ref, b_ref, wpsi_ref,
                      bpsi_ref, o_ref):
    """Fused hot path.

    g_ref    : (nb, f_g, T)   gating-signal block (I/O dtype)
    x_ref    : (nb, f_l, T)   skip-connection block (I/O dtype)
    wg_ref   : (f_int, f_g)   BN-folded conv weight (I/O dtype)
    wx_ref   : (f_int, f_l)   BN-folded conv weight (I/O dtype)
    b_ref    : (f_int, 1)     combined folded BN bias (f32)
    wpsi_ref : (1, f_int)     BN-folded gating weight (I/O dtype)
    bpsi_ref : (1, 1)         folded gating bias (f32)
    o_ref    : (nb, f_l, T)   gated output block (I/O dtype)
    """
    wg = wg_ref[...]
    wx = wx_ref[...]
    wpsi = wpsi_ref[...]
    b = b_ref[...]
    bpsi = bpsi_ref[...]

    # nb is a small compile-time constant (<= 8); the unrolled loop keeps every
    # matmul 2-D (no batched dot_general -> no leading-dim transpose in Mosaic).
    for n in range(nb):
        g = g_ref[n]                                   # (f_g, T)
        x = x_ref[n]                                   # (f_l, T)

        # Stage 1: both 1x1 convs (BN folded into the weights), one f32 bias.
        s = jnp.dot(wg, g, preferred_element_type=jnp.float32)
        s = s + jnp.dot(wx, x, preferred_element_type=jnp.float32)
        s = s + b                                      # lane-broadcast bias

        # relu, then stage 2 (f_int -> 1) in the I/O dtype, f32 accumulation.
        psi = jnp.maximum(s, 0.0).astype(wpsi.dtype)
        p = jnp.dot(wpsi, psi, preferred_element_type=jnp.float32) + bpsi

        # Exact sigmoid: HBM-bound kernel, transcendental slots are free.
        gate = 1.0 / (1.0 + jnp.exp(-p))               # (1, T), f32

        # Gate the skip connection in the I/O dtype (bf16 on the fast path;
        # pass f32 inputs on v5e which has no bf16 VALU anyway).
        o_ref[n] = (gate.astype(x.dtype) * x).astype(o_ref.dtype)


# --------------------------------------------------------------------------- #
# Tiling heuristic (VMEM-aware, per-chip)
# --------------------------------------------------------------------------- #
def _choose_tiling(N, HW, f_g, f_l, f_int, itemsize, max_lanes_per_step=None):
    """Pick (nb, hw_tile, vmem_limit_bytes): large lane tiles that keep one
    double-buffered grid step comfortably inside this chip's VMEM."""
    try:
        vmem_cap = int(getattr(pltpu.get_tpu_info(), "vmem_capacity_bytes",
                               64 << 20))
    except Exception:
        vmem_cap = 64 << 20                            # conservative (v7x)

    sub = 8 * max(1, 4 // itemsize)                    # sublane pad (8/16/32)
    pad = lambda c, m: _round_up(max(int(c), 1), m)
    # Approximate VMEM bytes per lane-column of one grid step.
    io_per_lane = 2 * itemsize * (pad(f_g, sub) + 2 * pad(f_l, sub))  # dbuf I/O
    f32_per_lane = 4 * (2 * pad(f_int, 8) + pad(f_l, 8) + 16)         # scratch
    per_lane = io_per_lane + f32_per_lane

    if max_lanes_per_step is not None:
        cap = max(128, int(max_lanes_per_step))
    else:
        target = 128 * 1024 if vmem_cap >= (96 << 20) else 64 * 1024
        cap = max(128, min(target, (vmem_cap // 2) // per_lane))

    if HW >= cap:
        hw_tile = max(128, (cap // 128) * 128)         # multiple of 128
        nb = 1
    else:
        hw_tile = HW                 # full lane extent (allowed even if %128!=0)
        nb = min(N, max(1, cap // HW), 8)
        while N % nb:                # keep batch blocks exact (no partial nb)
            nb -= 1

    vmem_limit = int(min(max(vmem_cap - (8 << 20), 32 << 20), 112 << 20))
    return nb, hw_tile, vmem_limit


# --------------------------------------------------------------------------- #
# pallas_call wrapper (NCHW in, NCHW out; runs in the dtype of g/x)
# --------------------------------------------------------------------------- #
def attention_block(g_nchw, x_nchw, kparams, *, max_lanes_per_step=None):
    N, f_g, H, W = g_nchw.shape
    Nx, f_l, Hx, Wx = x_nchw.shape
    assert (N, H, W) == (Nx, Hx, Wx), "g and x must share batch/spatial dims"
    assert g_nchw.dtype == x_nchw.dtype
    dtype = g_nchw.dtype
    f_int = kparams["w_g"].shape[0]
    HW = H * W

    # Free reshapes: per-sample (C, H*W) is already contiguous in NCHW, so no
    # transpose / relayout HBM passes are paid around the kernel.
    g3 = g_nchw.reshape(N, f_g, HW)
    x3 = x_nchw.reshape(N, f_l, HW)

    # Tiny weights: cast to the I/O dtype here; biases stay f32 in-kernel.
    wg = jnp.asarray(kparams["w_g"], dtype)
    wx = jnp.asarray(kparams["w_x"], dtype)
    wpsi = jnp.asarray(kparams["w_psi"], dtype)
    b = jnp.asarray(kparams["b"], jnp.float32)
    bpsi = jnp.asarray(kparams["b_psi"], jnp.float32)

    nb, hw_tile, vmem_limit = _choose_tiling(
        N, HW, f_g, f_l, f_int, jnp.dtype(dtype).itemsize, max_lanes_per_step)

    grid = (pl.cdiv(N, nb), pl.cdiv(HW, hw_tile))
    tiled = lambda c: pl.BlockSpec((nb, c, hw_tile), lambda bi, si: (bi, 0, si))
    const = lambda shp: pl.BlockSpec(shp, lambda bi, si: (0,) * len(shp))

    out = pl.pallas_call(
        functools.partial(_attention_kernel, nb),
        out_shape=jax.ShapeDtypeStruct((N, f_l, HW), dtype),
        grid_spec=pltpu.PrefetchScalarGridSpec(
            num_scalar_prefetch=0,
            grid=grid,
            in_specs=[
                tiled(f_g),                  # g block   (nb, f_g, T)
                tiled(f_l),                  # x block   (nb, f_l, T)
                const((f_int, f_g)),         # folded W_g
                const((f_int, f_l)),         # folded W_x
                const((f_int, 1)),           # combined folded bias
                const((1, f_int)),           # folded W_psi
                const((1, 1)),               # folded psi bias
            ],
            out_specs=tiled(f_l),            # lane-dense store
        ),
        # Both grid axes are independent -> megacore / 2-TC sharding allowed.
        # TODO(synk): confirm via xprof that v7x splits this grid across both
        # TensorCores; if not, add a leading CORE_PARALLEL axis of size 2.
        compiler_params=pltpu.CompilerParams(
            dimension_semantics=("parallel", "parallel"),
            vmem_limit_bytes=vmem_limit,
        ),
    )(g3, x3, wg, wx, b, wpsi, bpsi)

    return out.reshape(N, f_l, H, W)


# --------------------------------------------------------------------------- #
# Parameter handling (matches the PyTorch module: Conv2d(k=1, bias=False) + BN)
# --------------------------------------------------------------------------- #
def make_raw_params(key, f_g, f_l, f_int):
    """Synthetic parameters in PyTorch-module shapes (conv weights (Cout, Cin))."""
    ks = jax.random.split(key, 6)

    def bn(k, c):
        kg, kb, km, kv = jax.random.split(k, 4)
        return dict(
            gamma=1.0 + 0.1 * jax.random.normal(kg, (c,), jnp.float32),
            beta=0.1 * jax.random.normal(kb, (c,), jnp.float32),
            mean=0.1 * jax.random.normal(km, (c,), jnp.float32),
            var=jnp.abs(1.0 + 0.1 * jax.random.normal(kv, (c,), jnp.float32)),
        )

    return dict(
        w_g=0.2 * jax.random.normal(ks[0], (f_int, f_g), jnp.float32),
        w_x=0.2 * jax.random.normal(ks[1], (f_int, f_l), jnp.float32),
        w_psi=0.2 * jax.random.normal(ks[2], (1, f_int), jnp.float32),
        bn_g=bn(ks[3], f_int),
        bn_x=bn(ks[4], f_int),
        bn_psi=bn(ks[5], 1),
    )


def _fold_bn(bn, eps=1e-5):
    scale = bn["gamma"] / jnp.sqrt(bn["var"] + eps)
    shift = bn["beta"] - bn["mean"] * scale
    return scale, shift


def fold_params(raw):
    """Fold eval-mode BatchNorm into the 1x1-conv weights (all f32; the wrapper
    casts weights to the I/O dtype, biases stay f32)."""
    sg, bg = _fold_bn(raw["bn_g"])
    sx, bx = _fold_bn(raw["bn_x"])
    sp, bp = _fold_bn(raw["bn_psi"])
    return dict(
        w_g=raw["w_g"] * sg[:, None],                      # (f_int, f_g)
        w_x=raw["w_x"] * sx[:, None],                      # (f_int, f_l)
        b=(bg + bx).reshape(-1, 1).astype(jnp.float32),    # (f_int, 1)
        w_psi=raw["w_psi"] * sp[:, None],                  # (1, f_int)
        b_psi=bp.reshape(1, 1).astype(jnp.float32),        # (1, 1)
    )


# --------------------------------------------------------------------------- #
# Pure-JAX reference, faithful to the PyTorch module (eval-mode BN)
# --------------------------------------------------------------------------- #
def attention_block_ref(g_nchw, x_nchw, raw, eps=1e-5):
    def conv_bn(t, w, bn):
        y = jnp.einsum("oc,nchw->nohw", w, t)
        s = bn["gamma"] / jnp.sqrt(bn["var"] + eps)
        sh = bn["beta"] - bn["mean"] * s
        return y * s[None, :, None, None] + sh[None, :, None, None]

    g1 = conv_bn(g_nchw, raw["w_g"], raw["bn_g"])
    x1 = conv_bn(x_nchw, raw["w_x"], raw["bn_x"])
    psi = jnp.maximum(g1 + x1, 0.0)
    p = conv_bn(psi, raw["w_psi"], raw["bn_psi"])
    return jax.nn.sigmoid(p) * x_nchw


# --------------------------------------------------------------------------- #
if __name__ == "__main__":
    key = jax.random.PRNGKey(0)
    kcases = jax.random.split(key, 4)

    def run_case(k, N, f_g, f_l, f_int, H, W, dtype, max_lanes, atol, rtol):
        kg, kx, kw = jax.random.split(k, 3)
        g = jax.random.normal(kg, (N, f_g, H, W), jnp.float32)
        x = jax.random.normal(kx, (N, f_l, H, W), jnp.float32)
        raw = make_raw_params(kw, f_g, f_l, f_int)
        ref = attention_block_ref(g, x, raw)
        out = attention_block(g.astype(dtype), x.astype(dtype),
                              fold_params(raw), max_lanes_per_step=max_lanes)
        out = jax.block_until_ready(out)
        assert out.shape == x.shape and out.dtype == dtype
        out32 = out.astype(jnp.float32)
        err = jnp.max(jnp.abs(out32 - ref))
        assert jnp.allclose(out32, ref, atol=atol, rtol=rtol), f"max abs err {err}"

    # 1) Module-consistent small shape, auto tiling (nb=2 packed, single step):
    #    f32 path (tight-ish) and bf16 fast path.
    run_case(kcases[0], 2, 4, 4, 8, 16, 16, jnp.float32, None, 2e-2, 2e-2)
    run_case(kcases[1], 2, 4, 4, 8, 16, 16, jnp.bfloat16, None, 6e-2, 6e-2)
    # 2) Multi-step spatial grid with a partial last lane block (HW=448, T=256).
    run_case(kcases[2], 2, 4, 4, 8, 16, 28, jnp.float32, 256, 2e-2, 2e-2)
    # 3) H*W not a multiple of 128 + two batch samples packed per grid step.
    run_case(kcases[3], 4, 4, 4, 8, 10, 10, jnp.float32, 256, 2e-2, 2e-2)

    print("KERNEL_OK")
</pallas_src>

<mosaic_0001>
module attributes {stable_mosaic.version = 11 : i64} {
  func.func @_attention_kernel(%arg0: i32, %arg1: i32, %arg2: memref<2x4x256xf32, #tpu.memory_space<vmem>>, %arg3: memref<2x4x256xf32, #tpu.memory_space<vmem>>, %arg4: memref<8x4xf32, #tpu.memory_space<vmem>>, %arg5: memref<8x4xf32, #tpu.memory_space<vmem>>, %arg6: memref<8x1xf32, #tpu.memory_space<vmem>>, %arg7: memref<1x8xf32, #tpu.memory_space<vmem>>, %arg8: memref<1x1xf32, #tpu.memory_space<vmem>>, %arg9: memref<2x4x256xf32, #tpu.memory_space<vmem>>) attributes {dimension_semantics = [#tpu.dimension_semantics<parallel>, #tpu.dimension_semantics<parallel>], iteration_bounds = array<i64: 1, 1>, scalar_prefetch = 0 : i64, scratch_operands = 0 : i64, tpu.core_type = #tpu.core_type<tc>, window_params = [{transform_indices = @transform_0, window_bounds = array<i64: 2, 4, 256>}, {transform_indices = @transform_1, window_bounds = array<i64: 2, 4, 256>}, {pipeline_mode = #tpu.pipeline_mode<synchronous>, transform_indices = @transform_2, window_bounds = array<i64: 8, 4>}, {pipeline_mode = #tpu.pipeline_mode<synchronous>, transform_indices = @transform_3, window_bounds = array<i64: 8, 4>}, {pipeline_mode = #tpu.pipeline_mode<synchronous>, transform_indices = @transform_4, window_bounds = array<i64: 8, 1>}, {pipeline_mode = #tpu.pipeline_mode<synchronous>, transform_indices = @transform_5, window_bounds = array<i64: 1, 8>}, {pipeline_mode = #tpu.pipeline_mode<synchronous>, transform_indices = @transform_6, window_bounds = array<i64: 1, 1>}, {transform_indices = @transform_7, window_bounds = array<i64: 2, 4, 256>}]} {
    %c0 = arith.constant 0 : index
    %c0_0 = arith.constant 0 : index
    %0 = vector.load %arg4[%c0, %c0_0] : memref<8x4xf32, #tpu.memory_space<vmem>>, vector<8x4xf32>
    %c0_1 = arith.constant 0 : index
    %c0_2 = arith.constant 0 : index
    %1 = vector.load %arg5[%c0_1, %c0_2] : memref<8x4xf32, #tpu.memory_space<vmem>>, vector<8x4xf32>
    %c0_3 = arith.constant 0 : index
    %c0_4 = arith.constant 0 : index
    %2 = vector.load %arg7[%c0_3, %c0_4] : memref<1x8xf32, #tpu.memory_space<vmem>>, vector<1x8xf32>
    %c0_5 = arith.constant 0 : index
    %c0_6 = arith.constant 0 : index
    %3 = vector.load %arg6[%c0_5, %c0_6] : memref<8x1xf32, #tpu.memory_space<vmem>>, vector<8x1xf32>
    %c0_7 = arith.constant 0 : index
    %c0_8 = arith.constant 0 : index
    %4 = vector.load %arg8[%c0_7, %c0_8] : memref<1x1xf32, #tpu.memory_space<vmem>>, vector<1x1xf32>
    %c0_9 = arith.constant 0 : index
    %c0_10 = arith.constant 0 : index
    %c0_11 = arith.constant 0 : index
    %5 = vector.load %arg2[%c0_9, %c0_10, %c0_11] : memref<2x4x256xf32, #tpu.memory_space<vmem>>, vector<1x4x256xf32>
    %6 = vector.shape_cast %5 : vector<1x4x256xf32> to vector<4x256xf32>
    %c0_12 = arith.constant 0 : index
    %c0_13 = arith.constant 0 : index
    %c0_14 = arith.constant 0 : index
    %7 = vector.load %arg3[%c0_12, %c0_13, %c0_14] : memref<2x4x256xf32, #tpu.memory_space<vmem>>, vector<1x4x256xf32>
    %8 = vector.shape_cast %7 : vector<1x4x256xf32> to vector<4x256xf32>
    %cst = arith.constant dense<0.000000e+00> : vector<8x256xf32>
    %9 = tpu.matmul %0, %6, %cst {dimension_numbers = #tpu.dot_dimension_numbers<[1], [0], [0], [1], [0, 0, 1, 1], [], []>} : vector<8x4xf32>, vector<4x256xf32>, vector<8x256xf32> -> vector<8x256xf32>
    %cst_15 = arith.constant dense<0.000000e+00> : vector<8x256xf32>
    %10 = tpu.matmul %1, %8, %cst_15 {dimension_numbers = #tpu.dot_dimension_numbers<[1], [0], [0], [1], [0, 0, 1, 1], [], []>} : vector<8x4xf32>, vector<4x256xf32>, vector<8x256xf32> -> vector<8x256xf32>
    %11 = arith.addf %9, %10 : vector<8x256xf32>
    %12 = vector.broadcast %3 : vector<8x1xf32> to vector<8x256xf32>
    %13 = arith.addf %11, %12 : vector<8x256xf32>
    %cst_16 = arith.constant 0.000000e+00 : f32
    %14 = vector.broadcast %cst_16 : f32 to vector<8x256xf32>
    %15 = arith.maximumf %13, %14 : vector<8x256xf32>
    %cst_17 = arith.constant dense<0.000000e+00> : vector<1x256xf32>
    %16 = tpu.matmul %2, %15, %cst_17 {dimension_numbers = #tpu.dot_dimension_numbers<[1], [0], [0], [1], [0, 0, 1, 1], [], []>} : vector<1x8xf32>, vector<8x256xf32>, vector<1x256xf32> -> vector<1x256xf32>
    %17 = vector.broadcast %4 : vector<1x1xf32> to vector<1x256xf32>
    %18 = arith.addf %16, %17 : vector<1x256xf32>
    %cst_18 = arith.constant 0.000000e+00 : f32
    %19 = vector.broadcast %cst_18 : f32 to vector<1x256xf32>
    %20 = arith.subf %19, %18 : vector<1x256xf32>
    %21 = math.exp %20 : vector<1x256xf32>
    %cst_19 = arith.constant 1.000000e+00 : f32
    %22 = vector.broadcast %cst_19 : f32 to vector<1x256xf32>
    %23 = arith.addf %22, %21 : vector<1x256xf32>
    %cst_20 = arith.constant 1.000000e+00 : f32
    %24 = vector.broadcast %cst_20 : f32 to vector<1x256xf32>
    %25 = arith.divf %24, %23 : vector<1x256xf32>
    %26 = vector.broadcast %25 : vector<1x256xf32> to vector<4x256xf32>
    %27 = arith.mulf %26, %8 : vector<4x256xf32>
    %c0_21 = arith.constant 0 : index
    %c0_22 = arith.constant 0 : index
    %c0_23 = arith.constant 0 : index
    %28 = vector.load %arg9[%c0_21, %c0_22, %c0_23] : memref<2x4x256xf32, #tpu.memory_space<vmem>>, vector<1x4x256xf32>
    %29 = vector.shape_cast %28 : vector<1x4x256xf32> to vector<4x256xf32>
    %30 = vector.shape_cast %27 : vector<4x256xf32> to vector<1x4x256xf32>
    tpu.vector_store %arg9[%c0_21, %c0_22, %c0_23], %30 {strides = array<i32>} : memref<2x4x256xf32, #tpu.memory_space<vmem>>, vector<1x4x256xf32>,
    %c1 = arith.constant 1 : index
    %c0_24 = arith.constant 0 : index
    %c0_25 = arith.constant 0 : index
    %31 = vector.load %arg2[%c1, %c0_24, %c0_25] : memref<2x4x256xf32, #tpu.memory_space<vmem>>, vector<1x4x256xf32>
    %32 = vector.shape_cast %31 : vector<1x4x256xf32> to vector<4x256xf32>
    %c1_26 = arith.constant 1 : index
    %c0_27 = arith.constant 0 : index
    %c0_28 = arith.constant 0 : index
    %33 = vector.load %arg3[%c1_26, %c0_27, %c0_28] : memref<2x4x256xf32, #tpu.memory_space<vmem>>, vector<1x4x256xf32>
    %34 = vector.shape_cast %33 : vector<1x4x256xf32> to vector<4x256xf32>
    %cst_29 = arith.constant dense<0.000000e+00> : vector<8x256xf32>
    %35 = tpu.matmul %0, %32, %cst_29 {dimension_numbers = #tpu.dot_dimension_numbers<[1], [0], [0], [1], [0, 0, 1, 1], [], []>} : vector<8x4xf32>, vector<4x256xf32>, vector<8x256xf32> -> vector<8x256xf32>
    %cst_30 = arith.constant dense<0.000000e+00> : vector<8x256xf32>
    %36 = tpu.matmul %1, %34, %cst_30 {dimension_numbers = #tpu.dot_dimension_numbers<[1], [0], [0], [1], [0, 0, 1, 1], [], []>} : vector<8x4xf32>, vector<4x256xf32>, vector<8x256xf32> -> vector<8x256xf32>
    %37 = arith.addf %35, %36 : vector<8x256xf32>
    %38 = vector.broadcast %3 : vector<8x1xf32> to vector<8x256xf32>
    %39 = arith.addf %37, %38 : vector<8x256xf32>
    %cst_31 = arith.constant 0.000000e+00 : f32
    %40 = vector.broadcast %cst_31 : f32 to vector<8x256xf32>
    %41 = arith.maximumf %39, %40 : vector<8x256xf32>
    %cst_32 = arith.constant dense<0.000000e+00> : vector<1x256xf32>
    %42 = tpu.matmul %2, %41, %cst_32 {dimension_numbers = #tpu.dot_dimension_numbers<[1], [0], [0], [1], [0, 0, 1, 1], [], []>} : vector<1x8xf32>, vector<8x256xf32>, vector<1x256xf32> -> vector<1x256xf32>
    %43 = vector.broadcast %4 : vector<1x1xf32> to vector<1x256xf32>
    %44 = arith.addf %42, %43 : vector<1x256xf32>
    %cst_33 = arith.constant 0.000000e+00 : f32
    %45 = vector.broadcast %cst_33 : f32 to vector<1x256xf32>
    %46 = arith.subf %45, %44 : vector<1x256xf32>
    %47 = math.exp %46 : vector<1x256xf32>
    %cst_34 = arith.constant 1.000000e+00 : f32
    %48 = vector.broadcast %cst_34 : f32 to vector<1x256xf32>
    %49 = arith.addf %48, %47 : vector<1x256xf32>
    %cst_35 = arith.constant 1.000000e+00 : f32
    %50 = vector.broadcast %cst_35 : f32 to vector<1x256xf32>
    %51 = arith.divf %50, %49 : vector<1x256xf32>
    %52 = vector.broadcast %51 : vector<1x256xf32> to vector<4x256xf32>
    %53 = arith.mulf %52, %34 : vector<4x256xf32>
    %c1_36 = arith.constant 1 : index
    %c0_37 = arith.constant 0 : index
    %c0_38 = arith.constant 0 : index
    %54 = vector.load %arg9[%c1_36, %c0_37, %c0_38] : memref<2x4x256xf32, #tpu.memory_space<vmem>>, vector<1x4x256xf32>
    %55 = vector.shape_cast %54 : vector<1x4x256xf32> to vector<4x256xf32>
    %56 = vector.shape_cast %53 : vector<4x256xf32> to vector<1x4x256xf32>
    tpu.vector_store %arg9[%c1_36, %c0_37, %c0_38], %56 {strides = array<i32>} : memref<2x4x256xf32, #tpu.memory_space<vmem>>, vector<1x4x256xf32>,
    return
  }
  func.func @transform_0(%arg0: i32, %arg1: i32) -> (i32, i32, i32) {
    %c0_i32 = arith.constant 0 : i32
    %c0_i32_0 = arith.constant 0 : i32
    return %arg0, %c0_i32, %arg1 : i32, i32, i32
  }
  func.func @transform_1(%arg0: i32, %arg1: i32) -> (i32, i32, i32) {
    %c0_i32 = arith.constant 0 : i32
    %c0_i32_0 = arith.constant 0 : i32
    return %arg0, %c0_i32, %arg1 : i32, i32, i32
  }
  func.func @transform_2(%arg0: i32, %arg1: i32) -> (i32, i32) {
    %c0_i32 = arith.constant 0 : i32
    %c0_i32_0 = arith.constant 0 : i32
    %c0_i32_1 = arith.constant 0 : i32
    return %c0_i32, %c0_i32_0 : i32, i32
  }
  func.func @transform_3(%arg0: i32, %arg1: i32) -> (i32, i32) {
    %c0_i32 = arith.constant 0 : i32
    %c0_i32_0 = arith.constant 0 : i32
    %c0_i32_1 = arith.constant 0 : i32
    return %c0_i32, %c0_i32_0 : i32, i32
  }
  func.func @transform_4(%arg0: i32, %arg1: i32) -> (i32, i32) {
    %c0_i32 = arith.constant 0 : i32
    %c0_i32_0 = arith.constant 0 : i32
    %c0_i32_1 = arith.constant 0 : i32
    return %c0_i32, %c0_i32_0 : i32, i32
  }
  func.func @transform_5(%arg0: i32, %arg1: i32) -> (i32, i32) {
    %c0_i32 = arith.constant 0 : i32
    %c0_i32_0 = arith.constant 0 : i32
    %c0_i32_1 = arith.constant 0 : i32
    return %c0_i32, %c0_i32_0 : i32, i32
  }
  func.func @transform_6(%arg0: i32, %arg1: i32) -> (i32, i32) {
    %c0_i32 = arith.constant 0 : i32
    %c0_i32_0 = arith.constant 0 : i32
    %c0_i32_1 = arith.constant 0 : i32
    return %c0_i32, %c0_i32_0 : i32, i32
  }
  func.func @transform_7(%arg0: i32, %arg1: i32) -> (i32, i32, i32) {
    %c0_i32 = arith.constant 0 : i32
    %c0_i32_0 = arith.constant 0 : i32
    return %arg0, %c0_i32, %arg1 : i32, i32, i32
  }
}

</mosaic_0001>

<llo_original>
// kernel: tpu_custom_call.1
$region0: #{tpu_custom_call.1}
  #allocation0 [shape = 'u32[]', space=smem, size = 0x4, offset = 0x4, fixed_abs, tag = 'smem constant byte address 0x4 - core index']
  #allocation1 [shape = 'u32[144,128]{1,0:T(1,128)}', space=vmem, size = 0x12000, scoped, tag = 'internal scratch']
  #allocation2 [shape = 'f32[1,1]{1,0:T(1,128)S(1)}', space=vmem, size = 0x200, scoped, tag = 'scoped memory for tpu_custom_call.1']
  %s0 = inlined_call_operand.vmem [shape: f32[2,4,256], index: 0, kind: input, shape index: {}]
  %s1 = inlined_call_operand.vmem [shape: f32[2,4,256], index: 1, kind: input, shape index: {}]
  %s2 = inlined_call_operand.vmem [shape: f32[8,4], index: 2, kind: input, shape index: {}]
  %s3 = inlined_call_operand.vmem [shape: f32[8,4], index: 3, kind: input, shape index: {}]
  %s4 = inlined_call_operand.vmem [shape: f32[8,1], index: 4, kind: input, shape index: {}]
  %s5 = inlined_call_operand.vmem [shape: f32[1,8], index: 5, kind: input, shape index: {}]
  %s6 = inlined_call_operand.<no memory space> [shape: f32[1,1], index: 6, kind: input, shape index: {}]
  %s7 = inlined_call_operand.hbm [shape: f32[2,4,256], index: 7, kind: output, shape index: {}]
  %s8 = sld [smem:[#allocation0]]
  $region38: #{tpu_custom_call.1} parent=0
    _
  %s10 = ssub.s32 1, %s8
  %s11 = scalar_select 0, %s10, %s8
  %v12 = vstv %s6
  %13 = vst [vmem:[#allocation2] sm:$0x1] %v12
  $region1: #{tpu_custom_call.1} parent=0
    #allocation3 [shape = 'u8[8192]{0}', space=vmem, size = 0x2000, scoped, tag = 'output window, operand 0, single buffered']
    #allocation4 [shape = 's32[1]{0}', space=sflag, size = 0x4, scoped, tag = 'scoped memory for tpu_custom_call.1']
    %14 = vsyncpa [#allocation4], 0
    // Predicated region
    $region2: #{tpu_custom_call.1} parent=1 // pred_check
      _
    $region3: #{tpu_custom_call.1} parent=1 // pred_check_branch
      %16 = sbr.rel (0) target = $region5
    $region4: #{tpu_custom_call.1} parent=1 // pred_region
      _
    $region5: #{tpu_custom_call.1} parent=1 // pred_fallthru
      _
    // Predicated region
    $region6: #{tpu_custom_call.1} parent=1 // pred_check
      _
    $region7: #{tpu_custom_call.1} parent=1 // pred_check_branch
      %18 = sbr.rel (0) target = $region9
    $region8: #{tpu_custom_call.1} parent=1 // pred_region
      _
    $region9: #{tpu_custom_call.1} parent=1 // pred_fallthru
      _
    // Predicated region
    $region10: #{tpu_custom_call.1} parent=1 // pred_check
      _
    $region11: #{tpu_custom_call.1} parent=1 // pred_check_branch
      %20 = sbr.rel (0) target = $region13
    $region12: #{tpu_custom_call.1} parent=1 // pred_region
      _
    $region13: #{tpu_custom_call.1} parent=1 // pred_fallthru
      _
    // Predicated region
    $region14: #{tpu_custom_call.1} parent=1 // pred_check
      _
    $region15: #{tpu_custom_call.1} parent=1 // pred_check_branch
      %22 = sbr.rel (0) target = $region17
    $region16: #{tpu_custom_call.1} parent=1 // pred_region
      _
    $region17: #{tpu_custom_call.1} parent=1 // pred_fallthru
      _
    // Predicated region
    $region18: #{tpu_custom_call.1} parent=1 // pred_check
      _
    $region19: #{tpu_custom_call.1} parent=1 // pred_check_branch
      %24 = sbr.rel (0) target = $region21
    $region20: #{tpu_custom_call.1} parent=1 // pred_region
      _
    $region21: #{tpu_custom_call.1} parent=1 // pred_fallthru
      _
    // Predicated region
    $region22: #{tpu_custom_call.1} parent=1 // pred_check
      _
    $region23: #{tpu_custom_call.1} parent=1 // pred_check_branch
      %26 = sbr.rel (0) target = $region25
    $region24: #{tpu_custom_call.1} parent=1 // pred_region
      _
    $region25: #{tpu_custom_call.1} parent=1 // pred_fallthru
      _
    // Predicated region
    $region26: #{tpu_custom_call.1} parent=1 // pred_check
      _
    $region27: #{tpu_custom_call.1} parent=1 // pred_check_branch
      %28 = sbr.rel (0) target = $region29
    $region28: #{tpu_custom_call.1} parent=1 // pred_region
      _
    $region29: #{tpu_custom_call.1} parent=1 // pred_fallthru
      _
    %v29 = vld [vmem:[%s2] sm:$0xff]
    %v30 = vld [vmem:[%s3] sm:$0xff]
    %v31 = vld [vmem:[%s5] sm:$0x1]
    %v32 = vld [vmem:[%s4] sm:$0xff]
    %v33 = vld [vmem:[#allocation2] sm:$0x1]
    %v34 = vld [vmem:[%s0] sm:$0xff]
    %v35 = vld [vmem:[%s1] sm:$0xff]
    %v37 = vcombine.high %v35, %v35
    %vm38 = vcmask 31744
    %v40 = vsel %vm38, %v30, 0
    %vm42 = vcmask 1043456
    %v43 = vsel %vm42, %v35, 0
    %v45 = vsel %vm42, %v37, 0
    %47 = vmatprep.subr.mxu0 %v45
    %48 = vmatpush1.msra.mxu0 %v43
    %49 = vmatprep.subr.mxu0 0.0
    %50 = vmatpush1.msra.mxu0 0.0
    %51 = vmatprep.subr.mxu0 0.0
    %52 = vmatpush1.msra.mxu0 0.0
    %53 = vmatprep.subr.mxu0 0.0
    %54 = vmatpush1.msra.mxu0 0.0
    %55 = vmatprep.subr.mxu0 0.0
    %56 = vmatpush1.msra.mxu0 0.0
    %57 = vmatprep.subr.mxu0 0.0
    %58 = vmatpush1.msra.mxu0 0.0
    %59 = vmatprep.subr.mxu0 0.0
    %60 = vmatpush1.msra.mxu0 0.0
    %61 = vmatprep.subr.mxu0 0.0
    %62 = vmatpush1.msra.mxu0 0.0
    %63 = vmatprep.subr.mxu0 0.0
    %64 = vmatpush1.msra.mxu0 0.0
    %65 = vmatprep.subr.mxu0 0.0
    %66 = vmatpush1.msra.mxu0 0.0
    %67 = vmatprep.subr.mxu0 0.0
    %68 = vmatpush1.msra.mxu0 0.0
    %69 = vmatprep.subr.mxu0 0.0
    %70 = vmatpush1.msra.mxu0 0.0
    %71 = vmatprep.subr.mxu0 0.0
    %72 = vmatpush1.msra.mxu0 0.0
    %73 = vmatprep.subr.mxu0 0.0
    %74 = vmatpush1.msra.mxu0 0.0
    %75 = vmatprep.subr.mxu0 0.0
    %76 = vmatpush1.msra.mxu0 0.0
    %77 = vmatprep.subr.mxu0 0.0
    %78 = vmatpush1.msra.mxu0 0.0
    %79 = vmatprep.subr.mxu0 0.0
    %80 = vmatpush1.msra.mxu0 0.0
    %81 = vmatprep.subr.mxu0 0.0
    %82 = vmatpush1.msra.mxu0 0.0
    %83 = vmatprep.subr.mxu0 0.0
    %84 = vmatpush1.msra.mxu0 0.0
    %85 = vmatprep.subr.mxu0 0.0
    %86 = vmatpush1.msra.mxu0 0.0
    %87 = vmatprep.subr.mxu0 0.0
    %88 = vmatpush1.msra.mxu0 0.0
    %89 = vmatprep.subr.mxu0 0.0
    %90 = vmatpush1.msra.mxu0 0.0
    %91 = vmatprep.subr.mxu0 0.0
    %92 = vmatpush1.msra.mxu0 0.0
    %93 = vmatprep.subr.mxu0 0.0
    %94 = vmatpush1.msra.mxu0 0.0
    %95 = vmatprep.subr.mxu0 0.0
    %96 = vmatpush1.msra.mxu0 0.0
    %97 = vmatprep.subr.mxu0 0.0
    %98 = vmatpush1.msra.mxu0 0.0
    %99 = vmatprep.subr.mxu0 0.0
    %100 = vmatpush1.msra.mxu0 0.0
    %101 = vmatprep.subr.mxu0 0.0
    %102 = vmatpush1.msra.mxu0 0.0
    %103 = vmatprep.subr.mxu0 0.0
    %104 = vmatpush1.msra.mxu0 0.0
    %105 = vmatprep.subr.mxu0 0.0
    %106 = vmatpush1.msra.mxu0 0.0
    %107 = vmatprep.subr.mxu0 0.0
    %108 = vmatpush1.msra.mxu0 0.0
    %109 = vmatprep.subr.mxu0 0.0
    %110 = vmatpush1.msra.mxu0 0.0
    %111 = vmatprep.mubr.f32.mxu0 0.0
    %112 = vmatmul.mubr.f32.gmra.mrb[0].mxu0 %v40
    %v113 = vpop.f32.mrb[0].mxu0
    %v114 = vadd.f32 0.0, %v113
    %v115 = vpop.f32.mrb[0].mxu0
    %v116 = vadd.f32 0.0, %v115
    %117 = vdwg.mxu0
    %v119 = vcombine.high %v34, %v34
    %v121 = vsel %vm38, %v29, 0
    %v123 = vsel %vm42, %v34, 0
    %v125 = vsel %vm42, %v119, 0
    %127 = vmatprep.subr.mxu0 %v125
    %128 = vmatpush1.msra.mxu0 %v123
    %129 = vmatprep.subr.mxu0 0.0
    %130 = vmatpush1.msra.mxu0 0.0
    %131 = vmatprep.subr.mxu0 0.0
    %132 = vmatpush1.msra.mxu0 0.0
    %133 = vmatprep.subr.mxu0 0.0
    %134 = vmatpush1.msra.mxu0 0.0
    %135 = vmatprep.subr.mxu0 0.0
    %136 = vmatpush1.msra.mxu0 0.0
    %137 = vmatprep.subr.mxu0 0.0
    %138 = vmatpush1.msra.mxu0 0.0
    %139 = vmatprep.subr.mxu0 0.0
    %140 = vmatpush1.msra.mxu0 0.0
    %141 = vmatprep.subr.mxu0 0.0
    %142 = vmatpush1.msra.mxu0 0.0
    %143 = vmatprep.subr.mxu0 0.0
    %144 = vmatpush1.msra.mxu0 0.0
    %145 = vmatprep.subr.mxu0 0.0
    %146 = vmatpush1.msra.mxu0 0.0
    %147 = vmatprep.subr.mxu0 0.0
    %148 = vmatpush1.msra.mxu0 0.0
    %149 = vmatprep.subr.mxu0 0.0
    %150 = vmatpush1.msra.mxu0 0.0
    %151 = vmatprep.subr.mxu0 0.0
    %152 = vmatpush1.msra.mxu0 0.0
    %153 = vmatprep.subr.mxu0 0.0
    %154 = vmatpush1.msra.mxu0 0.0
    %155 = vmatprep.subr.mxu0 0.0
    %156 = vmatpush1.msra.mxu0 0.0
    %157 = vmatprep.subr.mxu0 0.0
    %158 = vmatpush1.msra.mxu0 0.0
    %159 = vmatprep.subr.mxu0 0.0
    %160 = vmatpush1.msra.mxu0 0.0
    %161 = vmatprep.subr.mxu0 0.0
    %162 = vmatpush1.msra.mxu0 0.0
    %163 = vmatprep.subr.mxu0 0.0
    %164 = vmatpush1.msra.mxu0 0.0
    %165 = vmatprep.subr.mxu0 0.0
    %166 = vmatpush1.msra.mxu0 0.0
    %167 = vmatprep.subr.mxu0 0.0
    %168 = vmatpush1.msra.mxu0 0.0
    %169 = vmatprep.subr.mxu0 0.0
    %170 = vmatpush1.msra.mxu0 0.0
    %171 = vmatprep.subr.mxu0 0.0
    %172 = vmatpush1.msra.mxu0 0.0
    %173 = vmatprep.subr.mxu0 0.0
    %174 = vmatpush1.msra.mxu0 0.0
    %175 = vmatprep.subr.mxu0 0.0
    %176 = vmatpush1.msra.mxu0 0.0
    %177 = vmatprep.subr.mxu0 0.0
    %178 = vmatpush1.msra.mxu0 0.0
    %179 = vmatprep.subr.mxu0 0.0
    %180 = vmatpush1.msra.mxu0 0.0
    %181 = vmatprep.subr.mxu0 0.0
    %182 = vmatpush1.msra.mxu0 0.0
    %183 = vmatprep.subr.mxu0 0.0
    %184 = vmatpush1.msra.mxu0 0.0
    %185 = vmatprep.subr.mxu0 0.0
    %186 = vmatpush1.msra.mxu0 0.0
    %187 = vmatprep.subr.mxu0 0.0
    %188 = vmatpush1.msra.mxu0 0.0
    %189 = vmatprep.subr.mxu0 0.0
    %190 = vmatpush1.msra.mxu0 0.0
    %191 = vmatprep.mubr.f32.mxu0 0.0
    %192 = vmatmul.mubr.f32.gmra.mrb[0].mxu0 %v121
    %v193 = vpop.f32.mrb[0].mxu0
    %v194 = vadd.f32 %v114, %v193
    %v195 = vpop.f32.mrb[0].mxu0
    %v196 = vadd.f32 %v116, %v195
    %197 = vdwg.mxu0
    %199 = vset.pattern.permute.xlu0 0
    %200 = vperm.xlu0 %199, %v32
    %v201 = vpop.permute.xlu0 %200
    %v203 = vadd.f32 %v194, %v201
    %v204 = vadd.f32 %v196, %v201
    %v205 = vmax.f32 %v203, 0.0
    %v206 = vmax.f32 %v204, 0.0
    %208 = vset.pattern.permute.xlu0 0
    %209 = vperm.xlu0 %208, %v33
    %v210 = vpop.permute.xlu0 %209
    %v212 = vlaneseq
    %v213 = vshrl.u32 %v212, 7
    %v214 = vsub.s32 0, %v213
    %v215 = vrot.slane %v210, %v214
    %vm216 = vcmask 64512
    %v218 = vsel %vm216, %v31, 0
    %220 = vmatprep.subr.mxu0 %v206
    %221 = vmatpush1.msra.mxu0 %v205
    %222 = vmatprep.subr.mxu0 0.0
    %223 = vmatpush1.msra.mxu0 0.0
    %224 = vmatprep.subr.mxu0 0.0
    %225 = vmatpush1.msra.mxu0 0.0
    %226 = vmatprep.subr.mxu0 0.0
    %227 = vmatpush1.msra.mxu0 0.0
    %228 = vmatprep.subr.mxu0 0.0
    %229 = vmatpush1.msra.mxu0 0.0
    %230 = vmatprep.subr.mxu0 0.0
    %231 = vmatpush1.msra.mxu0 0.0
    %232 = vmatprep.subr.mxu0 0.0
    %233 = vmatpush1.msra.mxu0 0.0
    %234 = vmatprep.subr.mxu0 0.0
    %235 = vmatpush1.msra.mxu0 0.0
    %236 = vmatprep.subr.mxu0 0.0
    %237 = vmatpush1.msra.mxu0 0.0
    %238 = vmatprep.subr.mxu0 0.0
    %239 = vmatpush1.msra.mxu0 0.0
    %240 = vmatprep.subr.mxu0 0.0
    %241 = vmatpush1.msra.mxu0 0.0
    %242 = vmatprep.subr.mxu0 0.0
    %243 = vmatpush1.msra.mxu0 0.0
    %244 = vmatprep.subr.mxu0 0.0
    %245 = vmatpush1.msra.mxu0 0.0
    %246 = vmatprep.subr.mxu0 0.0
    %247 = vmatpush1.msra.mxu0 0.0
    %248 = vmatprep.subr.mxu0 0.0
    %249 = vmatpush1.msra.mxu0 0.0
    %250 = vmatprep.subr.mxu0 0.0
    %251 = vmatpush1.msra.mxu0 0.0
    %252 = vmatprep.subr.mxu0 0.0
    %253 = vmatpush1.msra.mxu0 0.0
    %254 = vmatprep.subr.mxu0 0.0
    %255 = vmatpush1.msra.mxu0 0.0
    %256 = vmatprep.subr.mxu0 0.0
    %257 = vmatpush1.msra.mxu0 0.0
    %258 = vmatprep.subr.mxu0 0.0
    %259 = vmatpush1.msra.mxu0 0.0
    %260 = vmatprep.subr.mxu0 0.0
    %261 = vmatpush1.msra.mxu0 0.0
    %262 = vmatprep.subr.mxu0 0.0
    %263 = vmatpush1.msra.mxu0 0.0
    %264 = vmatprep.subr.mxu0 0.0
    %265 = vmatpush1.msra.mxu0 0.0
    %266 = vmatprep.subr.mxu0 0.0
    %267 = vmatpush1.msra.mxu0 0.0
    %268 = vmatprep.subr.mxu0 0.0
    %269 = vmatpush1.msra.mxu0 0.0
    %270 = vmatprep.subr.mxu0 0.0
    %271 = vmatpush1.msra.mxu0 0.0
    %272 = vmatprep.subr.mxu0 0.0
    %273 = vmatpush1.msra.mxu0 0.0
    %274 = vmatprep.subr.mxu0 0.0
    %275 = vmatpush1.msra.mxu0 0.0
    %276 = vmatprep.subr.mxu0 0.0
    %277 = vmatpush1.msra.mxu0 0.0
    %278 = vmatprep.subr.mxu0 0.0
    %279 = vmatpush1.msra.mxu0 0.0
    %280 = vmatprep.subr.mxu0 0.0
    %281 = vmatpush1.msra.mxu0 0.0
    %282 = vmatprep.subr.mxu0 0.0
    %283 = vmatpush1.msra.mxu0 0.0
    %284 = vmatprep.mubr.f32.mxu0 0.0
    %285 = vmatmul.mubr.f32.gmra.mrb[0].mxu0 %v218
    %v286 = vpop.f32.mrb[0].mxu0
    %v287 = vadd.f32 %v215, %v286
    %v288 = vpop.f32.mrb[0].mxu0
    %v289 = vadd.f32 %v215, %v288
    %290 = vdwg.mxu0
    %v291 = vsub.f32 0.0, %v287
    %v292 = vsub.f32 0.0, %v289
    %v293 = vmul.f32 %v291, 1.442695
    %v294 = vpow.pop %v293
    %v295 = vmul.f32 %v292, 1.442695
    %v296 = vpow.pop %v295
    %v297 = vadd.f32 %v294, 1.0
    %v298 = vadd.f32 %v296, 1.0
    %v299 = vrcp.pop %v297
    %v300 = vmul.f32 1.0, %v299
    %v301 = vrcp.pop %v298
    %v302 = vmul.f32 1.0, %v301
    %v303 = vlaneseq
    %v304 = vshrl.u32 %v303, 7
    %v305 = vsub.s32 0, %v304
    %v306 = vrot.slane %v300, %v305
    %v307 = vlaneseq
    %v308 = vshrl.u32 %v307, 7
    %v309 = vsub.s32 0, %v308
    %v310 = vrot.slane %v302, %v309
    %v312 = vmul.f32 %v306, %v35
    %v313 = vmul.f32 %v310, %v37
    %v316 = vcombine.low %v312, %v313
    %318 = vst [vmem:[#allocation3] sm:$0xff] %v316
    %s319 = scalar_lea.vmem %s0, 8
    %v320 = vld [vmem:[%s319] sm:$0xff]
    %s321 = scalar_lea.vmem %s1, 8
    %v322 = vld [vmem:[%s321] sm:$0xff]
    %v324 = vcombine.high %v322, %v322
    %v325 = vsel %vm42, %v322, 0
    %v327 = vsel %vm42, %v324, 0
    %329 = vmatprep.subr.mxu0 %v327
    %330 = vmatpush1.msra.mxu0 %v325
    %331 = vmatprep.subr.mxu0 0.0
    %332 = vmatpush1.msra.mxu0 0.0
    %333 = vmatprep.subr.mxu0 0.0
    %334 = vmatpush1.msra.mxu0 0.0
    %335 = vmatprep.subr.mxu0 0.0
    %336 = vmatpush1.msra.mxu0 0.0
    %337 = vmatprep.subr.mxu0 0.0
    %338 = vmatpush1.msra.mxu0 0.0
    %339 = vmatprep.subr.mxu0 0.0
    %340 = vmatpush1.msra.mxu0 0.0
    %341 = vmatprep.subr.mxu0 0.0
    %342 = vmatpush1.msra.mxu0 0.0
    %343 = vmatprep.subr.mxu0 0.0
    %344 = vmatpush1.msra.mxu0 0.0
    %345 = vmatprep.subr.mxu0 0.0
    %346 = vmatpush1.msra.mxu0 0.0
    %347 = vmatprep.subr.mxu0 0.0
    %348 = vmatpush1.msra.mxu0 0.0
    %349 = vmatprep.subr.mxu0 0.0
    %350 = vmatpush1.msra.mxu0 0.0
    %351 = vmatprep.subr.mxu0 0.0
    %352 = vmatpush1.msra.mxu0 0.0
    %353 = vmatprep.subr.mxu0 0.0
    %354 = vmatpush1.msra.mxu0 0.0
    %355 = vmatprep.subr.mxu0 0.0
    %356 = vmatpush1.msra.mxu0 0.0
    %357 = vmatprep.subr.mxu0 0.0
    %358 = vmatpush1.msra.mxu0 0.0
    %359 = vmatprep.subr.mxu0 0.0
    %360 = vmatpush1.msra.mxu0 0.0
    %361 = vmatprep.subr.mxu0 0.0
    %362 = vmatpush1.msra.mxu0 0.0
    %363 = vmatprep.subr.mxu0 0.0
    %364 = vmatpush1.msra.mxu0 0.0
    %365 = vmatprep.subr.mxu0 0.0
    %366 = vmatpush1.msra.mxu0 0.0
    %367 = vmatprep.subr.mxu0 0.0
    %368 = vmatpush1.msra.mxu0 0.0
    %369 = vmatprep.subr.mxu0 0.0
    %370 = vmatpush1.msra.mxu0 0.0
    %371 = vmatprep.subr.mxu0 0.0
    %372 = vmatpush1.msra.mxu0 0.0
    %373 = vmatprep.subr.mxu0 0.0
    %374 = vmatpush1.msra.mxu0 0.0
    %375 = vmatprep.subr.mxu0 0.0
    %376 = vmatpush1.msra.mxu0 0.0
    %377 = vmatprep.subr.mxu0 0.0
    %378 = vmatpush1.msra.mxu0 0.0
    %379 = vmatprep.subr.mxu0 0.0
    %380 = vmatpush1.msra.mxu0 0.0
    %381 = vmatprep.subr.mxu0 0.0
    %382 = vmatpush1.msra.mxu0 0.0
    %383 = vmatprep.subr.mxu0 0.0
    %384 = vmatpush1.msra.mxu0 0.0
    %385 = vmatprep.subr.mxu0 0.0
    %386 = vmatpush1.msra.mxu0 0.0
    %387 = vmatprep.subr.mxu0 0.0
    %388 = vmatpush1.msra.mxu0 0.0
    %389 = vmatprep.subr.mxu0 0.0
    %390 = vmatpush1.msra.mxu0 0.0
    %391 = vmatprep.subr.mxu0 0.0
    %392 = vmatpush1.msra.mxu0 0.0
    %393 = vmatprep.mubr.f32.mxu0 0.0
    %394 = vmatmul.mubr.f32.gmra.mrb[0].mxu0 %v40
    %v395 = vpop.f32.mrb[0].mxu0
    %v396 = vadd.f32 0.0, %v395
    %v397 = vpop.f32.mrb[0].mxu0
    %v398 = vadd.f32 0.0, %v397
    %399 = vdwg.mxu0
    %v401 = vcombine.high %v320, %v320
    %v402 = vsel %vm42, %v320, 0
    %v404 = vsel %vm42, %v401, 0
    %406 = vmatprep.subr.mxu0 %v404
    %407 = vmatpush1.msra.mxu0 %v402
    %408 = vmatprep.subr.mxu0 0.0
    %409 = vmatpush1.msra.mxu0 0.0
    %410 = vmatprep.subr.mxu0 0.0
    %411 = vmatpush1.msra.mxu0 0.0
    %412 = vmatprep.subr.mxu0 0.0
    %413 = vmatpush1.msra.mxu0 0.0
    %414 = vmatprep.subr.mxu0 0.0
    %415 = vmatpush1.msra.mxu0 0.0
    %416 = vmatprep.subr.mxu0 0.0
    %417 = vmatpush1.msra.mxu0 0.0
    %418 = vmatprep.subr.mxu0 0.0
    %419 = vmatpush1.msra.mxu0 0.0
    %420 = vmatprep.subr.mxu0 0.0
    %421 = vmatpush1.msra.mxu0 0.0
    %422 = vmatprep.subr.mxu0 0.0
    %423 = vmatpush1.msra.mxu0 0.0
    %424 = vmatprep.subr.mxu0 0.0
    %425 = vmatpush1.msra.mxu0 0.0
    %426 = vmatprep.subr.mxu0 0.0
    %427 = vmatpush1.msra.mxu0 0.0
    %428 = vmatprep.subr.mxu0 0.0
    %429 = vmatpush1.msra.mxu0 0.0
    %430 = vmatprep.subr.mxu0 0.0
    %431 = vmatpush1.msra.mxu0 0.0
    %432 = vmatprep.subr.mxu0 0.0
    %433 = vmatpush1.msra.mxu0 0.0
    %434 = vmatprep.subr.mxu0 0.0
    %435 = vmatpush1.msra.mxu0 0.0
    %436 = vmatprep.subr.mxu0 0.0
    %437 = vmatpush1.msra.mxu0 0.0
    %438 = vmatprep.subr.mxu0 0.0
    %439 = vmatpush1.msra.mxu0 0.0
    %440 = vmatprep.subr.mxu0 0.0
    %441 = vmatpush1.msra.mxu0 0.0
    %442 = vmatprep.subr.mxu0 0.0
    %443 = vmatpush1.msra.mxu0 0.0
    %444 = vmatprep.subr.mxu0 0.0
    %445 = vmatpush1.msra.mxu0 0.0
    %446 = vmatprep.subr.mxu0 0.0
    %447 = vmatpush1.msra.mxu0 0.0
    %448 = vmatprep.subr.mxu0 0.0
    %449 = vmatpush1.msra.mxu0 0.0
    %450 = vmatprep.subr.mxu0 0.0
    %451 = vmatpush1.msra.mxu0 0.0
    %452 = vmatprep.subr.mxu0 0.0
    %453 = vmatpush1.msra.mxu0 0.0
    %454 = vmatprep.subr.mxu0 0.0
    %455 = vmatpush1.msra.mxu0 0.0
    %456 = vmatprep.subr.mxu0 0.0
    %457 = vmatpush1.msra.mxu0 0.0
    %458 = vmatprep.subr.mxu0 0.0
    %459 = vmatpush1.msra.mxu0 0.0
    %460 = vmatprep.subr.mxu0 0.0
    %461 = vmatpush1.msra.mxu0 0.0
    %462 = vmatprep.subr.mxu0 0.0
    %463 = vmatpush1.msra.mxu0 0.0
    %464 = vmatprep.subr.mxu0 0.0
    %465 = vmatpush1.msra.mxu0 0.0
    %466 = vmatprep.subr.mxu0 0.0
    %467 = vmatpush1.msra.mxu0 0.0
    %468 = vmatprep.subr.mxu0 0.0
    %469 = vmatpush1.msra.mxu0 0.0
    %470 = vmatprep.mubr.f32.mxu0 0.0
    %471 = vmatmul.mubr.f32.gmra.mrb[0].mxu0 %v121
    %v472 = vpop.f32.mrb[0].mxu0
    %v473 = vadd.f32 %v396, %v472
    %v474 = vpop.f32.mrb[0].mxu0
    %v475 = vadd.f32 %v398, %v474
    %476 = vdwg.mxu0
    %v477 = vadd.f32 %v473, %v201
    %v478 = vadd.f32 %v475, %v201
    %v479 = vmax.f32 %v477, 0.0
    %v480 = vmax.f32 %v478, 0.0
    %481 = vmatprep.subr.mxu0 %v480
    %482 = vmatpush1.msra.mxu0 %v479
    %483 = vmatprep.subr.mxu0 0.0
    %484 = vmatpush1.msra.mxu0 0.0
    %485 = vmatprep.subr.mxu0 0.0
    %486 = vmatpush1.msra.mxu0 0.0
    %487 = vmatprep.subr.mxu0 0.0
    %488 = vmatpush1.msra.mxu0 0.0
    %489 = vmatprep.subr.mxu0 0.0
    %490 = vmatpush1.msra.mxu0 0.0
    %491 = vmatprep.subr.mxu0 0.0
    %492 = vmatpush1.msra.mxu0 0.0
    %493 = vmatprep.subr.mxu0 0.0
    %494 = vmatpush1.msra.mxu0 0.0
    %495 = vmatprep.subr.mxu0 0.0
    %496 = vmatpush1.msra.mxu0 0.0
    %497 = vmatprep.subr.mxu0 0.0
    %498 = vmatpush1.msra.mxu0 0.0
    %499 = vmatprep.subr.mxu0 0.0
    %500 = vmatpush1.msra.mxu0 0.0
    %501 = vmatprep.subr.mxu0 0.0
    %502 = vmatpush1.msra.mxu0 0.0
    %503 = vmatprep.subr.mxu0 0.0
    %504 = vmatpush1.msra.mxu0 0.0
    %505 = vmatprep.subr.mxu0 0.0
    %506 = vmatpush1.msra.mxu0 0.0
    %507 = vmatprep.subr.mxu0 0.0
    %508 = vmatpush1.msra.mxu0 0.0
    %509 = vmatprep.subr.mxu0 0.0
    %510 = vmatpush1.msra.mxu0 0.0
    %511 = vmatprep.subr.mxu0 0.0
    %512 = vmatpush1.msra.mxu0 0.0
    %513 = vmatprep.subr.mxu0 0.0
    %514 = vmatpush1.msra.mxu0 0.0
    %515 = vmatprep.subr.mxu0 0.0
    %516 = vmatpush1.msra.mxu0 0.0
    %517 = vmatprep.subr.mxu0 0.0
    %518 = vmatpush1.msra.mxu0 0.0
    %519 = vmatprep.subr.mxu0 0.0
    %520 = vmatpush1.msra.mxu0 0.0
    %521 = vmatprep.subr.mxu0 0.0
    %522 = vmatpush1.msra.mxu0 0.0
    %523 = vmatprep.subr.mxu0 0.0
    %524 = vmatpush1.msra.mxu0 0.0
    %525 = vmatprep.subr.mxu0 0.0
    %526 = vmatpush1.msra.mxu0 0.0
    %527 = vmatprep.subr.mxu0 0.0
    %528 = vmatpush1.msra.mxu0 0.0
    %529 = vmatprep.subr.mxu0 0.0
    %530 = vmatpush1.msra.mxu0 0.0
    %531 = vmatprep.subr.mxu0 0.0
    %532 = vmatpush1.msra.mxu0 0.0
    %533 = vmatprep.subr.mxu0 0.0
    %534 = vmatpush1.msra.mxu0 0.0
    %535 = vmatprep.subr.mxu0 0.0
    %536 = vmatpush1.msra.mxu0 0.0
    %537 = vmatprep.subr.mxu0 0.0
    %538 = vmatpush1.msra.mxu0 0.0
    %539 = vmatprep.subr.mxu0 0.0
    %540 = vmatpush1.msra.mxu0 0.0
    %541 = vmatprep.subr.mxu0 0.0
    %542 = vmatpush1.msra.mxu0 0.0
    %543 = vmatprep.subr.mxu0 0.0
    %544 = vmatpush1.msra.mxu0 0.0
    %545 = vmatprep.mubr.f32.mxu0 0.0
    %546 = vmatmul.mubr.f32.gmra.mrb[0].mxu0 %v218
    %v547 = vpop.f32.mrb[0].mxu0
    %v548 = vadd.f32 %v215, %v547
    %v549 = vpop.f32.mrb[0].mxu0
    %v550 = vadd.f32 %v215, %v549
    %551 = vdwg.mxu0
    %v552 = vsub.f32 0.0, %v548
    %v553 = vsub.f32 0.0, %v550
    %v554 = vmul.f32 %v552, 1.442695
    %v555 = vpow.pop %v554
    %v556 = vmul.f32 %v553, 1.442695
    %v557 = vpow.pop %v556
    %v558 = vadd.f32 %v555, 1.0
    %v559 = vadd.f32 %v557, 1.0
    %v560 = vrcp.pop %v558
    %v561 = vmul.f32 1.0, %v560
    %v562 = vrcp.pop %v559
    %v563 = vmul.f32 1.0, %v562
    %v564 = vlaneseq
    %v565 = vshrl.u32 %v564, 7
    %v566 = vsub.s32 0, %v565
    %v567 = vrot.slane %v561, %v566
    %v568 = vlaneseq
    %v569 = vshrl.u32 %v568, 7
    %v570 = vsub.s32 0, %v569
    %v571 = vrot.slane %v563, %v570
    %v573 = vmul.f32 %v567, %v322
    %v574 = vmul.f32 %v571, %v324
    %v577 = vcombine.low %v573, %v574
    %s579 = scalar_lea.vmem [#allocation3], 8
    %580 = vst [vmem:[%s579] sm:$0xff] %v577
    // Predicated region
    $region30: #{tpu_custom_call.1} parent=1 // pred_check
      _
    $region31: #{tpu_custom_call.1} parent=1 // pred_check_branch
      %582 = sbr.rel (0) target = $region33
    $region32: #{tpu_custom_call.1} parent=1 // pred_region
      %s584 = ssub.s32 256, 256
      %585 = vsyncadd [#allocation4], %s584
      %s586 = sshll.u32 [#allocation3], 4
      %s587 = int_to_ptr.vmem [resolvable:$true] %s586
      %592 = dma.vmem_to_hbm [thread:$0]  %s587, 256, %s7, [#allocation4], 128, 128, 8
    $region33: #{tpu_custom_call.1} parent=1 // pred_fallthru
      _
    // Predicated region
    $region34: #{tpu_custom_call.1} parent=1 // pred_check
      _
    $region35: #{tpu_custom_call.1} parent=1 // pred_check_branch
      %594 = sbr.rel (0) target = $region37
    $region36: #{tpu_custom_call.1} parent=1 // pred_region
      %595 = dma.done [#allocation4], 256
    $region37: #{tpu_custom_call.1} parent=1 // pred_fallthru
      _
    %596 = vsyncpa [#allocation4], 1

</llo_original>
